<compile_context>
chip_gen: v7x
topology: tpu7x:2x2x1
jax: 0.10.0
libtpu: 0.0.40
codegen_flags: <defaults>
</compile_context>

<pallas_src>
import jax
import jax.numpy as jnp
from jax.experimental import pallas as pl
from jax.experimental.pallas import tpu as pltpu

_LANES = 128
_MAX_BLOCK_ROWS = 2048   # (2048, 128) f32 tile ~= 1 MiB
_FUSED_MAX_ROWS = 8192   # <= 4 MiB per buffer -> single fused VMEM-resident pass


def _fused_kernel(x_ref, o_ref):
    """Whole (padded) tensor resident in VMEM: min + scale in one pass."""
    xv = x_ref[...].astype(jnp.float32)
    # vreg-aligned regrouping: min over the leading (major) axis is pure VPU
    # element-wise minimum across vregs; only the final (8,128) reduce uses XLU.
    pmin = jnp.min(xv.reshape(-1, 8, xv.shape[-1]), axis=0)
    x_min = jnp.min(pmin)
    mul = 4.0 / (x_min * 256.0)
    o_ref[...] = (xv * mul).astype(o_ref.dtype)


def _min_mul_kernel(x_ref, mul_ref, pmin_ref):
    """Pass 1: accumulate an (8,128) running min; emit mul=4/(min*256) at the end."""
    step = pl.program_id(0)

    @pl.when(step == 0)
    def _():
        pmin_ref[...] = jnp.full_like(pmin_ref, jnp.inf)

    xv = x_ref[...].astype(jnp.float32)                       # (block_rows, 128)
    tile_min = jnp.min(xv.reshape(-1, 8, xv.shape[-1]), axis=0)
    pmin_ref[...] = jnp.minimum(pmin_ref[...], tile_min)

    @pl.when(step == pl.num_programs(0) - 1)
    def _():
        x_min = jnp.min(pmin_ref[...], keepdims=True)         # (1, 1)
        mul_ref[...] = 4.0 / (x_min * 256.0)


def _scale_kernel(mul_ref, x_ref, o_ref):
    """Pass 2: out = x * mul, multiplier read once per tile, no divides."""
    mul = mul_ref[0, 0]
    o_ref[...] = (x_ref[...].astype(jnp.float32) * mul).astype(o_ref.dtype)


def shift_norm(x: jnp.ndarray) -> jnp.ndarray:
    """x: NCHW float tensor. Returns x * 4 / (x.min() / 2**-8)."""
    orig_shape = x.shape
    orig_dtype = x.dtype
    total = x.size

    # Lane-dense (block_rows, 128) tiling; block_rows a multiple of 8.
    rows_needed = -(-total // _LANES)
    block_rows = min(_MAX_BLOCK_ROWS, ((rows_needed + 7) // 8) * 8)
    padded_rows = ((rows_needed + block_rows - 1) // block_rows) * block_rows
    padded_total = padded_rows * _LANES
    num_tiles = padded_rows // block_rows

    x_flat = x.reshape(-1)
    if padded_total != total:
        # +inf padding cannot win the global min; padded outputs are sliced away.
        pad = jnp.full((padded_total - total,), jnp.inf, dtype=orig_dtype)
        x_flat = jnp.concatenate([x_flat, pad])
    x2d = x_flat.reshape(padded_rows, _LANES)
    itemsize = x2d.dtype.itemsize

    if padded_rows <= _FUSED_MAX_ROWS:
        # ---- Fused single pass: whole tensor fits comfortably in VMEM ----
        out2d = pl.pallas_call(
            _fused_kernel,
            out_shape=jax.ShapeDtypeStruct((padded_rows, _LANES), orig_dtype),
            grid_spec=pltpu.PrefetchScalarGridSpec(
                num_scalar_prefetch=0,
                grid=(1,),
                in_specs=[pl.BlockSpec((padded_rows, _LANES), lambda i: (0, 0))],
                out_specs=pl.BlockSpec((padded_rows, _LANES), lambda i: (0, 0)),
            ),
            compiler_params=pltpu.CompilerParams(
                dimension_semantics=("arbitrary",),
                vmem_limit_bytes=32 * 1024 * 1024,
            ),
            cost_estimate=pl.CostEstimate(
                flops=2 * padded_total,
                transcendentals=0,
                bytes_accessed=2 * padded_total * itemsize,
            ),
        )(x2d)
    else:
        # ---- Pass 1: tiled global-min reduction -> (1,1) multiplier ----
        mul = pl.pallas_call(
            _min_mul_kernel,
            out_shape=jax.ShapeDtypeStruct((1, 1), jnp.float32),
            grid_spec=pltpu.PrefetchScalarGridSpec(
                num_scalar_prefetch=0,
                grid=(num_tiles,),
                in_specs=[pl.BlockSpec((block_rows, _LANES), lambda i: (i, 0))],
                out_specs=pl.BlockSpec((1, 1), lambda i: (0, 0)),
                scratch_shapes=[pltpu.VMEM((8, _LANES), jnp.float32)],
            ),
            compiler_params=pltpu.CompilerParams(
                dimension_semantics=("arbitrary",),
                vmem_limit_bytes=32 * 1024 * 1024,
            ),
            cost_estimate=pl.CostEstimate(
                flops=padded_total,
                transcendentals=0,
                bytes_accessed=padded_total * itemsize,
            ),
        )(x2d)

        # ---- Pass 2: tiled element-wise scale by the precomputed multiplier ----
        out2d = pl.pallas_call(
            _scale_kernel,
            out_shape=jax.ShapeDtypeStruct((padded_rows, _LANES), orig_dtype),
            grid_spec=pltpu.PrefetchScalarGridSpec(
                num_scalar_prefetch=0,
                grid=(num_tiles,),
                in_specs=[
                    pl.BlockSpec((1, 1), lambda i: (0, 0)),
                    pl.BlockSpec((block_rows, _LANES), lambda i: (i, 0)),
                ],
                out_specs=pl.BlockSpec((block_rows, _LANES), lambda i: (i, 0)),
            ),
            compiler_params=pltpu.CompilerParams(
                dimension_semantics=("parallel",),   # shard across both TCs on v7x
                vmem_limit_bytes=32 * 1024 * 1024,
            ),
            cost_estimate=pl.CostEstimate(
                flops=padded_total,
                transcendentals=0,
                bytes_accessed=2 * padded_total * itemsize,
            ),
        )(mul, x2d)

    out_flat = out2d.reshape(-1)
    if padded_total != total:
        out_flat = out_flat[:total]
    return out_flat.reshape(orig_shape)


def shift_norm_ref(x: jnp.ndarray) -> jnp.ndarray:
    min_representable = 2.0 ** (-8)
    x_min = jnp.min(x)
    scale = x_min / min_representable
    return x * 4.0 / scale


if __name__ == "__main__":
    key = jax.random.PRNGKey(0)

    # Small NCHW input consistent with a conv-style module: (N=2, C=4, H=16, W=16).
    # Exercises the fused single-pass path.
    x_small = jax.random.normal(key, (2, 4, 16, 16), dtype=jnp.float32)
    out_small = jax.block_until_ready(shift_norm(x_small))
    ref_small = shift_norm_ref(x_small)
    assert out_small.shape == x_small.shape and out_small.dtype == x_small.dtype
    assert jnp.allclose(out_small, ref_small, rtol=1e-5, atol=1e-5)

    # Larger input to exercise the two-pass tiled (streaming) path.
    key2 = jax.random.fold_in(key, 1)
    x_big = jax.random.normal(key2, (4, 8, 256, 256), dtype=jnp.float32)
    out_big = jax.block_until_ready(shift_norm(x_big))
    ref_big = shift_norm_ref(x_big)
    assert out_big.shape == x_big.shape and out_big.dtype == x_big.dtype
    assert jnp.allclose(out_big, ref_big, rtol=1e-5, atol=1e-5)

    print("KERNEL_OK")
</pallas_src>

<mosaic_0001>
module attributes {stable_mosaic.version = 11 : i64} {
  func.func @_fused_kernel(%arg0: i32, %arg1: memref<16x128xf32, #tpu.memory_space<vmem>>, %arg2: memref<16x128xf32, #tpu.memory_space<vmem>>) attributes {dimension_semantics = [#tpu.dimension_semantics<arbitrary>], iteration_bounds = array<i64: 1>, scalar_prefetch = 0 : i64, scratch_operands = 0 : i64, tpu.core_type = #tpu.core_type<tc>, window_params = [{pipeline_mode = #tpu.pipeline_mode<synchronous>, transform_indices = @transform_0, window_bounds = array<i64: 16, 128>}, {pipeline_mode = #tpu.pipeline_mode<synchronous>, transform_indices = @transform_1, window_bounds = array<i64: 16, 128>}]} {
    %c0 = arith.constant 0 : index
    %c0_0 = arith.constant 0 : index
    %0 = vector.load %arg1[%c0, %c0_0] : memref<16x128xf32, #tpu.memory_space<vmem>>, vector<16x128xf32>
    %1 = vector.shape_cast %0 : vector<16x128xf32> to vector<2x8x128xf32>
    %cst = arith.constant dense<0x7F800000> : vector<8x128xf32>
    %2 = vector.multi_reduction <minimumf>, %1, %cst [0] : vector<2x8x128xf32> to vector<8x128xf32>
    %3 = vector.shape_cast %2 : vector<8x128xf32> to vector<1x8x128xf32>
    %cst_1 = arith.constant dense<0x7F800000> : vector<1xf32>
    %4 = vector.multi_reduction <minimumf>, %3, %cst_1 [1, 2] : vector<1x8x128xf32> to vector<1xf32>
    %5 = vector.shape_cast %4 : vector<1xf32> to vector<1x1x1xf32>
    %6 = vector.extract %5[0, 0, 0] : f32 from vector<1x1x1xf32>
    %cst_2 = arith.constant 2.560000e+02 : f32
    %7 = arith.mulf %6, %cst_2 : f32
    %cst_3 = arith.constant 4.000000e+00 : f32
    %8 = arith.divf %cst_3, %7 : f32
    %9 = vector.broadcast %8 : f32 to vector<16x128xf32>
    %10 = arith.mulf %0, %9 : vector<16x128xf32>
    %c0_4 = arith.constant 0 : index
    %c0_5 = arith.constant 0 : index
    %11 = vector.load %arg2[%c0_4, %c0_5] : memref<16x128xf32, #tpu.memory_space<vmem>>, vector<16x128xf32>
    tpu.vector_store %arg2[%c0_4, %c0_5], %10 {strides = array<i32>} : memref<16x128xf32, #tpu.memory_space<vmem>>, vector<16x128xf32>,
    return
  }
  func.func @transform_0(%arg0: i32) -> (i32, i32) {
    %c0_i32 = arith.constant 0 : i32
    %c0_i32_0 = arith.constant 0 : i32
    %c0_i32_1 = arith.constant 0 : i32
    return %c0_i32, %c0_i32_0 : i32, i32
  }
  func.func @transform_1(%arg0: i32) -> (i32, i32) {
    %c0_i32 = arith.constant 0 : i32
    %c0_i32_0 = arith.constant 0 : i32
    %c0_i32_1 = arith.constant 0 : i32
    return %c0_i32, %c0_i32_0 : i32, i32
  }
}

</mosaic_0001>

<llo_original>
// kernel: tpu_custom_call.1
$region0: #{tpu_custom_call.1}
  #allocation0 [shape = 'u32[]', space=smem, size = 0x4, offset = 0x4, fixed_abs, tag = 'smem constant byte address 0x4 - core index']
  #allocation1 [shape = 'u32[144,128]{1,0:T(1,128)}', space=vmem, size = 0x12000, scoped, tag = 'internal scratch']
  %s0 = inlined_call_operand.hbm [shape: f32[16,128], index: 0, kind: input, shape index: {}]
  %s1 = inlined_call_operand.hbm [shape: f32[16,128], index: 1, kind: output, shape index: {}]
  %s2 = sld [smem:[#allocation0]]
  $region18: #{tpu_custom_call.1} parent=0
    _
  %s4 = ssub.s32 1, %s2
  %s5 = scalar_select 0, %s4, %s2
  $region1: #{tpu_custom_call.1} parent=0
    #allocation2 [shape = 'u8[8192]{0}', space=vmem, size = 0x2000, scoped, tag = 'input window, operand 0, single buffered']
    #allocation3 [shape = 's32[1]{0}', space=sflag, size = 0x4, scoped, tag = 'scoped memory for tpu_custom_call.1']
    #allocation4 [shape = 's32[1]{0}', space=sflag, size = 0x4, scoped, tag = 'scoped memory for tpu_custom_call.1']
    #allocation5 [shape = 'u8[8192]{0}', space=vmem, size = 0x2000, scoped, tag = 'output window, operand 0, single buffered']
    %6 = vsyncpa [#allocation3], 0
    %7 = vsyncpa [#allocation4], 0
    // Predicated region
    $region2: #{tpu_custom_call.1} parent=1 // pred_check
      _
    $region3: #{tpu_custom_call.1} parent=1 // pred_check_branch
      %9 = sbr.rel (0) target = $region5
    $region4: #{tpu_custom_call.1} parent=1 // pred_region
      %s11 = ssub.s32 256, 256
      %12 = vsyncadd [#allocation3], %s11
      %s13 = sshll.u32 [#allocation2], 4
      %s14 = int_to_ptr.vmem [resolvable:$true] %s13
      %19 = dma.hbm_to_vmem [thread:$0]  %s0, 256, %s14, [#allocation3], 128, 128, 8
    $region5: #{tpu_custom_call.1} parent=1 // pred_fallthru
      _
    // Predicated region
    $region6: #{tpu_custom_call.1} parent=1 // pred_check
      _
    $region7: #{tpu_custom_call.1} parent=1 // pred_check_branch
      %21 = sbr.rel (0) target = $region9
    $region8: #{tpu_custom_call.1} parent=1 // pred_region
      %22 = dma.done [#allocation3], 256
    $region9: #{tpu_custom_call.1} parent=1 // pred_fallthru
      _
    %v23 = vld [vmem:[#allocation2] sm:$0xff]
    %v24 = vld [vmem:[#allocation2 + $0x8] sm:$0xff]
    %v25 = vmin.f32 %v23, %v24
    %26 = vmin.xlane.f32.xlu0 %v25
    %v27 = vpop.xlane.xlu0 %26
    %v28 = vrot.slane %v27, 4
    %v29 = vmin.f32 %v27, %v28
    %v30 = vrot.slane %v29, 2
    %v31 = vmin.f32 %v29, %v30
    %v32 = vrot.slane %v31, 1
    %v33 = vmin.f32 %v31, %v32
    %s34 = vtos %v33
    %s35 = smul.f32 %s34, 256.0
    %v36 = vstv %s35
    %v37 = vrcp.pop %v36
    %s38 = vtos %v37
    %s39 = smul.f32 4.0, %s38
    %v40 = vstv %s39
    %v41 = vmul.f32 %v23, %v40
    %v42 = vmul.f32 %v24, %v40
    %43 = vst [vmem:[#allocation5] sm:$0xff] %v41
    %44 = vst [vmem:[#allocation5 + $0x8] sm:$0xff] %v42
    // Predicated region
    $region10: #{tpu_custom_call.1} parent=1 // pred_check
      _
    $region11: #{tpu_custom_call.1} parent=1 // pred_check_branch
      %46 = sbr.rel (0) target = $region13
    $region12: #{tpu_custom_call.1} parent=1 // pred_region
      %s48 = ssub.s32 256, 256
      %49 = vsyncadd [#allocation4], %s48
      %s50 = sshll.u32 [#allocation5], 4
      %s51 = int_to_ptr.vmem [resolvable:$true] %s50
      %56 = dma.vmem_to_hbm [thread:$0]  %s51, 256, %s1, [#allocation4], 128, 128, 8
    $region13: #{tpu_custom_call.1} parent=1 // pred_fallthru
      _
    // Predicated region
    $region14: #{tpu_custom_call.1} parent=1 // pred_check
      _
    $region15: #{tpu_custom_call.1} parent=1 // pred_check_branch
      %58 = sbr.rel (0) target = $region17
    $region16: #{tpu_custom_call.1} parent=1 // pred_region
      %59 = dma.done [#allocation4], 256
    $region17: #{tpu_custom_call.1} parent=1 // pred_fallthru
      _
    %60 = vsyncpa [#allocation3], 1
    %61 = vsyncpa [#allocation4], 1

</llo_original>
